<compile_context>
chip_gen: v5e
topology: v5e:2x2
jax: 0.10.0
libtpu: 0.0.40
codegen_flags: <defaults>
</compile_context>

<pallas_src>
import math

import jax
import jax.numpy as jnp
from jax.experimental import pallas as pl
from jax.experimental.pallas import tpu as pltpu


_TILE_TARGET_BYTES = 2 << 20      # ~2 MiB per output tile (soft target)
_LANE_TARGET = 2048               # aim for ~16 vregs of lane width


def _expand_static_context_kernel(ctx_ref, out_ref, row_ref):
    """ctx_ref: (TB, H); out_ref, row_ref: (TB, TT*H)."""
    _, h = ctx_ref.shape
    tt = out_ref.shape[1] // h

    # Build the lane-dense "one period" row once per batch tile (t == 0).
    @pl.when(pl.program_id(1) == 0)
    def _build():
        ctx = ctx_ref[...]
        for k in range(tt):                       # static, unrolled
            row_ref[:, k * h:(k + 1) * h] = ctx

    # Every time tile is just a full-lane copy of the scratch row.
    out_ref[...] = row_ref[...]


def _choose_tiles(B, T, H, itemsize):
    """Pick (TB, TT): batch rows and timesteps per output block.

    Legality: the folded out block is (TB, TT*H).  TT*H must be a multiple of
    128 (or TT == T); TB must be a multiple of the sublane packing (or == B).
    """
    # --- time tile (lane direction after the T*H fold) ---
    step = 128 // math.gcd(H, 128)            # smallest TT with (TT*H) % 128 == 0
    tt = max(step, (_LANE_TARGET // max(step * H, 1)) * step)
    TT = T if tt >= T else tt
    L = TT * H

    # --- batch tile (sublane direction) ---
    sublane = {4: 8, 2: 16, 1: 32}.get(itemsize, 8)
    target_rows = max(sublane, (_TILE_TARGET_BYTES // itemsize) // max(L, 1))
    if B <= target_rows:
        TB = B                                 # full dim -> always legal
    else:
        TB = max(sublane, (target_rows // sublane) * sublane)
    return TB, TT


def expand_static_context(context: jax.Array, timesteps: int, *,
                          use_pallas: bool = True) -> jax.Array:
    """Pallas equivalent of `context[:, None].expand(-1, timesteps, -1)`."""
    B, H = context.shape
    T = int(timesteps)

    if not use_pallas:
        # Let XLA fuse the broadcast into the consumer (zero HBM traffic).
        return jnp.broadcast_to(context[:, None, :], (B, T, H))

    itemsize = jnp.dtype(context.dtype).itemsize
    TB, TT = _choose_tiles(B, T, H, itemsize)
    L = TT * H
    TH = T * H

    out_flat = pl.pallas_call(
        _expand_static_context_kernel,
        out_shape=jax.ShapeDtypeStruct((B, TH), context.dtype),
        grid_spec=pltpu.PrefetchScalarGridSpec(
            num_scalar_prefetch=0,
            grid=(pl.cdiv(B, TB), pl.cdiv(T, TT)),
            in_specs=[pl.BlockSpec((TB, H), lambda i, t: (i, 0))],
            out_specs=pl.BlockSpec((TB, L), lambda i, t: (i, t)),
            scratch_shapes=[pltpu.VMEM((TB, L), context.dtype)],
        ),
        compiler_params=pltpu.CompilerParams(
            dimension_semantics=("parallel", "arbitrary")),
        cost_estimate=pl.CostEstimate(
            flops=0, transcendentals=0,
            bytes_accessed=(B * H + B * TH) * itemsize),
    )(context)
    # Zero-cost row-major view back to (B, T, H).
    return out_flat.reshape(B, T, H)


class EmptyStaticEncoder:
    """JAX/Pallas port of `empty_static_encoder`."""

    def __init__(self, input_sizes=None, hidden_size=32, dropout=0.0,
                 lstm_layers=1):
        # The PyTorch module registers no parameters; nothing to initialize.
        self.hidden_size = hidden_size

    def forward(self, embeddings, timesteps=None):
        # Matches the PyTorch forward exactly: no compute, four Nones.
        return (None, None, None, None)

    def expand_static_context(self, context, timesteps):
        """Add time dimension to static context (Pallas kernel)."""
        return expand_static_context(context, timesteps)


if __name__ == "__main__":
    key = jax.random.PRNGKey(0)
    k_emb, k_ctx, k_ctx2 = jax.random.split(key, 3)

    # Small shapes consistent with the module.
    B, T, H = 2, 8, 32
    embeddings = jax.random.normal(k_emb, (B, T, H), dtype=jnp.float32)
    context = jax.random.normal(k_ctx, (B, H), dtype=jnp.float32)

    enc = EmptyStaticEncoder(input_sizes=None, hidden_size=H, dropout=0.1,
                             lstm_layers=1)

    # forward() semantics: returns (None, None, None, None).
    assert enc.forward(embeddings, timesteps=T) == (None, None, None, None)

    # expand_static_context via the Pallas kernel (single-block path).
    expanded = jax.block_until_ready(enc.expand_static_context(context, T))
    ref = jnp.broadcast_to(context[:, None, :], (B, T, H))
    assert expanded.shape == (B, T, H)
    assert expanded.dtype == context.dtype
    assert bool(jnp.all(expanded == ref))

    # Second check exercising the tiled multi-block path (several time tiles,
    # scratch row rebuilt per batch tile), still small.
    B2, T2, H2 = 16, 256, 32
    context2 = jax.random.normal(k_ctx2, (B2, H2), dtype=jnp.float32)
    expanded2 = jax.block_until_ready(expand_static_context(context2, T2))
    ref2 = jnp.broadcast_to(context2[:, None, :], (B2, T2, H2))
    assert expanded2.shape == (B2, T2, H2)
    assert bool(jnp.all(expanded2 == ref2))

    print("KERNEL_OK")
</pallas_src>

<mosaic_0001>
module attributes {stable_mosaic.version = 11 : i64} {
  func.func @_expand_static_context_kernel(%arg0: i32, %arg1: i32, %arg2: memref<2x32xf32, #tpu.memory_space<vmem>>, %arg3: memref<2x256xf32, #tpu.memory_space<vmem>>, %arg4: memref<2x256xf32, #tpu.memory_space<vmem>>) attributes {dimension_semantics = [#tpu.dimension_semantics<parallel>, #tpu.dimension_semantics<arbitrary>], iteration_bounds = array<i64: 1, 1>, scalar_prefetch = 0 : i64, scratch_operands = 1 : i64, tpu.core_type = #tpu.core_type<tc>, window_params = [{transform_indices = @transform_0, window_bounds = array<i64: 2, 32>}, {transform_indices = @transform_1, window_bounds = array<i64: 2, 256>}]} {
    %c0_i32 = arith.constant 0 : i32
    %0 = arith.cmpi eq, %arg1, %c0_i32 : i32
    %1 = arith.extui %0 : i1 to i32
    %c0_i32_0 = arith.constant 0 : i32
    %2 = arith.cmpi ne, %1, %c0_i32_0 : i32
    scf.if %2 {
      %c0_4 = arith.constant 0 : index
      %c0_5 = arith.constant 0 : index
      %5 = vector.load %arg2[%c0_4, %c0_5] : memref<2x32xf32, #tpu.memory_space<vmem>>, vector<2x32xf32>
      %c0_6 = arith.constant 0 : index
      %c0_7 = arith.constant 0 : index
      %6 = vector.load %arg4[%c0_6, %c0_7] : memref<2x256xf32, #tpu.memory_space<vmem>>, vector<2x32xf32>
      tpu.vector_store %arg4[%c0_6, %c0_7], %5 {strides = array<i32>} : memref<2x256xf32, #tpu.memory_space<vmem>>, vector<2x32xf32>,
      %c0_8 = arith.constant 0 : index
      %c32 = arith.constant 32 : index
      %7 = vector.load %arg4[%c0_8, %c32] : memref<2x256xf32, #tpu.memory_space<vmem>>, vector<2x32xf32>
      tpu.vector_store %arg4[%c0_8, %c32], %5 {strides = array<i32>} : memref<2x256xf32, #tpu.memory_space<vmem>>, vector<2x32xf32>,
      %c0_9 = arith.constant 0 : index
      %c64 = arith.constant 64 : index
      %8 = vector.load %arg4[%c0_9, %c64] : memref<2x256xf32, #tpu.memory_space<vmem>>, vector<2x32xf32>
      tpu.vector_store %arg4[%c0_9, %c64], %5 {strides = array<i32>} : memref<2x256xf32, #tpu.memory_space<vmem>>, vector<2x32xf32>,
      %c0_10 = arith.constant 0 : index
      %c96 = arith.constant 96 : index
      %9 = vector.load %arg4[%c0_10, %c96] : memref<2x256xf32, #tpu.memory_space<vmem>>, vector<2x32xf32>
      tpu.vector_store %arg4[%c0_10, %c96], %5 {strides = array<i32>} : memref<2x256xf32, #tpu.memory_space<vmem>>, vector<2x32xf32>,
      %c0_11 = arith.constant 0 : index
      %c128 = arith.constant 128 : index
      %10 = vector.load %arg4[%c0_11, %c128] : memref<2x256xf32, #tpu.memory_space<vmem>>, vector<2x32xf32>
      tpu.vector_store %arg4[%c0_11, %c128], %5 {strides = array<i32>} : memref<2x256xf32, #tpu.memory_space<vmem>>, vector<2x32xf32>,
      %c0_12 = arith.constant 0 : index
      %c160 = arith.constant 160 : index
      %11 = vector.load %arg4[%c0_12, %c160] : memref<2x256xf32, #tpu.memory_space<vmem>>, vector<2x32xf32>
      tpu.vector_store %arg4[%c0_12, %c160], %5 {strides = array<i32>} : memref<2x256xf32, #tpu.memory_space<vmem>>, vector<2x32xf32>,
      %c0_13 = arith.constant 0 : index
      %c192 = arith.constant 192 : index
      %12 = vector.load %arg4[%c0_13, %c192] : memref<2x256xf32, #tpu.memory_space<vmem>>, vector<2x32xf32>
      tpu.vector_store %arg4[%c0_13, %c192], %5 {strides = array<i32>} : memref<2x256xf32, #tpu.memory_space<vmem>>, vector<2x32xf32>,
      %c0_14 = arith.constant 0 : index
      %c224 = arith.constant 224 : index
      %13 = vector.load %arg4[%c0_14, %c224] : memref<2x256xf32, #tpu.memory_space<vmem>>, vector<2x32xf32>
      tpu.vector_store %arg4[%c0_14, %c224], %5 {strides = array<i32>} : memref<2x256xf32, #tpu.memory_space<vmem>>, vector<2x32xf32>,
    } else {
    }
    %c0 = arith.constant 0 : index
    %c0_1 = arith.constant 0 : index
    %3 = vector.load %arg4[%c0, %c0_1] : memref<2x256xf32, #tpu.memory_space<vmem>>, vector<2x256xf32>
    %c0_2 = arith.constant 0 : index
    %c0_3 = arith.constant 0 : index
    %4 = vector.load %arg3[%c0_2, %c0_3] : memref<2x256xf32, #tpu.memory_space<vmem>>, vector<2x256xf32>
    tpu.vector_store %arg3[%c0_2, %c0_3], %3 {strides = array<i32>} : memref<2x256xf32, #tpu.memory_space<vmem>>, vector<2x256xf32>,
    return
  }
  func.func @transform_0(%arg0: i32, %arg1: i32) -> (i32, i32) {
    %c0_i32 = arith.constant 0 : i32
    %c0_i32_0 = arith.constant 0 : i32
    return %arg0, %c0_i32 : i32, i32
  }
  func.func @transform_1(%arg0: i32, %arg1: i32) -> (i32, i32) {
    %c0_i32 = arith.constant 0 : i32
    return %arg0, %arg1 : i32, i32
  }
}

</mosaic_0001>

<llo_original>
// kernel: tpu_custom_call.1
$region0: #{tpu_custom_call.1}
  #allocation0 [shape = 'u32[]', space=smem, size = 0x4, offset = 0x4, fixed_abs, tag = 'smem constant byte address 0x4 - core index']
  #allocation1 [shape = 'u32[72,128]{1,0:T(1,128)}', space=vmem, size = 0x9000, scoped, tag = 'internal scratch']
  #allocation2 [shape = 'f32[2,256]{1,0:T(2,128)}', space=vmem, size = 0x800, scoped, tag = 'scratch operand']
  %s0 = inlined_call_operand.hbm [shape: f32[2,32], index: 0, kind: input, shape index: {}]
  %s1 = inlined_call_operand.hbm [shape: f32[2,256], index: 1, kind: output, shape index: {}]
  %s2 = sld [smem:[#allocation0]]
  $region22: #{tpu_custom_call.1} parent=0
    _
  %s4 = ssub.s32 1, %s2
  %s5 = scalar_select 0, %s4, %s2
  $region1: #{tpu_custom_call.1} parent=0
    #allocation3 [shape = 'u8[1024]{0}', space=vmem, size = 0x400, scoped, tag = 'input window, operand 0, single buffered']
    #allocation4 [shape = 's32[1]{0}', space=sflag, size = 0x4, scoped, tag = 'scoped memory for tpu_custom_call.1']
    #allocation5 [shape = 's32[1]{0}', space=sflag, size = 0x4, scoped, tag = 'scoped memory for tpu_custom_call.1']
    #allocation6 [shape = 'u8[2048]{0}', space=vmem, size = 0x800, scoped, tag = 'output window, operand 0, single buffered']
    %6 = vsyncpa [#allocation4], 0
    %7 = vsyncpa [#allocation5], 0
    // Predicated region
    $region2: #{tpu_custom_call.1} parent=1 // pred_check
      _
    $region3: #{tpu_custom_call.1} parent=1 // pred_check_branch
      %9 = sbr.rel (0) target = $region5
    $region4: #{tpu_custom_call.1} parent=1 // pred_region
      %11 = vsyncadd [#allocation4], 0
      %s13 = sshll.u32 %s0, 4
      %s14 = int_to_ptr.hbm [resolvable:$true] %s13
      %s15 = sshll.u32 [#allocation3], 4
      %s16 = int_to_ptr.vmem [resolvable:$true] %s15
      %18 = dma.hbm_to_vmem [thread:$0]  %s14, 32, %s16, [#allocation4]
    $region5: #{tpu_custom_call.1} parent=1 // pred_fallthru
      _
    // Predicated region
    $region6: #{tpu_custom_call.1} parent=1 // pred_check
      _
    $region7: #{tpu_custom_call.1} parent=1 // pred_check_branch
      %20 = sbr.rel (0) target = $region9
    $region8: #{tpu_custom_call.1} parent=1 // pred_region
      %22 = dma.done [#allocation4], 32
    $region9: #{tpu_custom_call.1} parent=1 // pred_fallthru
      _
    %p23 = scmp.eq.s32.totalorder 0, 0
    // Predicated region
    $region10: #{tpu_custom_call.1} parent=1 // pred_check
      %p24 = pneg %p23
    $region11: #{tpu_custom_call.1} parent=1 // pred_check_branch
      %26 = sbr.rel (%p24) target = $region13
    $region12: #{tpu_custom_call.1} parent=1 // pred_region
      %v27 = vld [vmem:[#allocation3] sm:$0x3]
      %vm28 = vcmask 254976
      %29 = vst.msk [vmem:[#allocation2] sm:$0x3] %vm28, %v27
      %31 = vrot.lane.b32.xlu0 %v27, 32
      %v32 = vpop.permute.xlu0 %31
      %vm34 = vcmask 517376
      %35 = vst.msk [vmem:[#allocation2] sm:$0x3] %vm34, %v32
      %36 = vrot.lane.b32.xlu0 %v27, 64
      %v37 = vpop.permute.xlu0 %36
      %vm39 = vcmask 779776
      %40 = vst.msk [vmem:[#allocation2] sm:$0x3] %vm39, %v37
      %41 = vrot.lane.b32.xlu0 %v27, 96
      %v42 = vpop.permute.xlu0 %41
      %vm44 = vcmask 1042176
      %45 = vst.msk [vmem:[#allocation2] sm:$0x3] %vm44, %v42
      %46 = vst.msk [vmem:[#allocation2 + $0x2] sm:$0x3] %vm28, %v27
      %47 = vst.msk [vmem:[#allocation2 + $0x2] sm:$0x3] %vm34, %v32
      %48 = vst.msk [vmem:[#allocation2 + $0x2] sm:$0x3] %vm39, %v37
      %49 = vst.msk [vmem:[#allocation2 + $0x2] sm:$0x3] %vm44, %v42
    $region13: #{tpu_custom_call.1} parent=1 // pred_fallthru
      _
    %v50 = vld [vmem:[#allocation2] sm:$0xf]
    %51 = vst [vmem:[#allocation6] sm:$0xf] %v50
    // Predicated region
    $region14: #{tpu_custom_call.1} parent=1 // pred_check
      _
    $region15: #{tpu_custom_call.1} parent=1 // pred_check_branch
      %53 = sbr.rel (0) target = $region17
    $region16: #{tpu_custom_call.1} parent=1 // pred_region
      %55 = vsyncadd [#allocation5], 0
      %s57 = sshll.u32 [#allocation6], 4
      %s58 = int_to_ptr.vmem [resolvable:$true] %s57
      %s59 = sshll.u32 %s1, 4
      %s60 = int_to_ptr.hbm [resolvable:$true] %s59
      %62 = dma.vmem_to_hbm [thread:$0]  %s58, 64, %s60, [#allocation5]
    $region17: #{tpu_custom_call.1} parent=1 // pred_fallthru
      _
    // Predicated region
    $region18: #{tpu_custom_call.1} parent=1 // pred_check
      _
    $region19: #{tpu_custom_call.1} parent=1 // pred_check_branch
      %64 = sbr.rel (0) target = $region21
    $region20: #{tpu_custom_call.1} parent=1 // pred_region
      %66 = dma.done [#allocation5], 64
    $region21: #{tpu_custom_call.1} parent=1 // pred_fallthru
      _
    %67 = vsyncpa [#allocation4], 1
    %68 = vsyncpa [#allocation5], 1

</llo_original>
